<compile_context>
chip_gen: v5e
topology: v5e:2x2
jax: 0.10.0
libtpu: 0.0.40
codegen_flags: <defaults>
</compile_context>

<pallas_src>
import functools

import jax
import jax.numpy as jnp
from jax import lax
from jax.experimental import pallas as pl
from jax.experimental.pallas import tpu as pltpu


# ----------------------------------------------------------------------------
# Fused Pallas kernel (2-layer LSTM, wavefront-scheduled)
# ----------------------------------------------------------------------------
def _fused_forward_kernel(ids_ref, feat_ref, g0_ref, wf0_ref, b0_ref,
                          wbig_ref, b1_ref, wout_ref, bout_ref, out_ref,
                          *, T, B, H, V):
    """Whole Model2 forward in one kernel (eval mode).

    VMEM refs, in order:
      ids  : (T*B, 1) int32   token ids, time-major flattened
      feat : (T*B, 1) f32     extra scalar feature
      g0   : (V, 4H)  bf16    embedding table pre-folded with layer-0 W_ih
      wf0  : (1, 4H)  f32     layer-0 W_ih column for the scalar feature
      b0   : (1, 4H)  f32     layer-0 (b_ih + b_hh)
      wbig : (2H, 8H) bf16    [[W_hh0^T, W_ih1^T], [0, W_hh1^T]]
      b1   : (1, 4H)  f32     layer-1 (b_ih + b_hh)
      wout : (H, OP)  bf16    head weight^T, zero-padded to OP lanes
      bout : (1, OP)  f32     head bias, zero-padded
      out  : (T*B, OP) f32    output (lane-dense; wrapper slices [:, :3])
    """
    TB = T * B
    H4 = 4 * H

    # ---- embedding gather (one-hot MXU matmul) folded with layer-0 W_ih ----
    # W_ih0 @ concat(E[id], feat) == (E @ W_ih0[:, :Ed]^T)[id] + feat * w_feat
    ids = ids_ref[...]                                            # (TB, 1) i32
    iota = lax.broadcasted_iota(jnp.int32, (TB, V), 1)
    one_hot = (ids == iota).astype(jnp.bfloat16)                  # (TB, V)
    xg0 = jnp.dot(one_hot, g0_ref[...],
                  preferred_element_type=jnp.float32)             # (TB, 4H)
    xg0 = xg0 + feat_ref[...] * wf0_ref[...] + b0_ref[...]
    # Pre-split into per-step (B, 4H) values outside the recurrence.
    xg0_steps = [xg0[t * B:(t + 1) * B, :] for t in range(T)]

    wbig = wbig_ref[...]                                          # (2H, 8H)
    b1 = b1_ref[...]                                              # (1, 4H)

    def lstm_update(gates, c):
        # One sigmoid + one tanh over the whole gate block, then slice
        # i/f/g/o (PyTorch gate order).
        sig = jax.nn.sigmoid(gates)
        th = jnp.tanh(gates)
        i_g = sig[:, 0 * H:1 * H]
        f_g = sig[:, 1 * H:2 * H]
        g_g = th[:, 2 * H:3 * H]
        o_g = sig[:, 3 * H:4 * H]
        c_new = f_g * c + i_g * g_g
        h_new = o_g * jnp.tanh(c_new)
        return h_new, c_new

    h0 = jnp.zeros((B, H), jnp.float32)
    c0 = jnp.zeros((B, H), jnp.float32)
    h1 = jnp.zeros((B, H), jnp.float32)
    c1 = jnp.zeros((B, H), jnp.float32)
    h1_steps = []

    # Wavefront over s = 0..T: layer-0 runs time s (s < T), layer-1 runs
    # time s-1 (s >= 1).  For s >= 1 one fused matmul
    #   [h0[s-1] | h1[s-2]] @ [[W_hh0^T, W_ih1^T], [0, W_hh1^T]]
    # yields layer-0's recurrent term (lanes 0:4H) and layer-1's full
    # pre-activation (lanes 4H:8H) in a single 256-lane MXU pass.
    for s in range(T + 1):                       # fully unrolled (T static)
        if s == 0:
            # Layer-0 time 0: h0 = c0 = 0, so the recurrent term vanishes.
            h0, c0 = lstm_update(xg0_steps[0], c0)
            continue

        lhs = jnp.concatenate([h0, h1], axis=1).astype(jnp.bfloat16)  # (B,2H)
        big = jnp.dot(lhs, wbig, preferred_element_type=jnp.float32)  # (B,8H)

        if s < T:
            gates0 = xg0_steps[s] + big[:, :H4]                   # (B, 4H)
            gates1 = big[:, H4:] + b1                             # (B, 4H)
            # Stack both layers' gates/cells: one sigmoid + one tanh total.
            g_stack = jnp.concatenate([gates0, gates1], axis=0)   # (2B, 4H)
            c_stack = jnp.concatenate([c0, c1], axis=0)           # (2B, H)
            h_stack, c_stack = lstm_update(g_stack, c_stack)
            h0, c0 = h_stack[:B], c_stack[:B]
            h1, c1 = h_stack[B:], c_stack[B:]
        else:
            # Tail step: only layer-1 (time T-1) remains.
            gates1 = big[:, H4:] + b1
            h1, c1 = lstm_update(gates1, c1)
        h1_steps.append(h1)

    # Linear head: one flat lane-dense matmul over the collected hidden seq.
    hseq = jnp.concatenate(h1_steps, axis=0).astype(jnp.bfloat16)  # (T*B, H)
    out_ref[...] = jnp.dot(hseq, wout_ref[...],
                           preferred_element_type=jnp.float32) + bout_ref[...]


# ----------------------------------------------------------------------------
# One-time parameter preparation (transpose / fold / pack / pad / cast)
# ----------------------------------------------------------------------------
def prepare_params(params):
    f32, bf16 = jnp.float32, jnp.bfloat16
    emb = params["embedding"].astype(f32)                   # (V, Ed)
    Ed = emb.shape[1]

    lstm = params["lstm"]
    assert len(lstm) == 2, "kernel is specialized to n_layers == 2"
    l0, l1 = lstm

    w_ih0 = l0["w_ih"].astype(f32)                          # (4H, Ed+1)
    H = w_ih0.shape[0] // 4
    # Fold embedding lookup + layer-0 input projection into one (V, 4H) table.
    # (PyTorch concat order is [embedding, feature]: columns 0:Ed, then Ed.)
    g0 = jnp.dot(emb, jnp.transpose(w_ih0[:, :Ed])).astype(bf16)   # (V, 4H)
    wf0 = w_ih0[:, Ed].reshape(1, 4 * H)                            # (1, 4H)
    b0 = (l0["b_ih"] + l0["b_hh"]).astype(f32).reshape(1, 4 * H)

    whh0 = jnp.transpose(l0["w_hh"].astype(f32))            # (H, 4H)
    wih1 = jnp.transpose(l1["w_ih"].astype(f32))            # (H, 4H)
    whh1 = jnp.transpose(l1["w_hh"].astype(f32))            # (H, 4H)
    b1 = (l1["b_ih"] + l1["b_hh"]).astype(f32).reshape(1, 4 * H)

    # Fused wavefront weight (2H, 8H): [[whh0, wih1], [0, whh1]] so that
    # [h0 | h1] @ wbig = [h0@whh0 , h0@wih1 + h1@whh1].
    top = jnp.concatenate([whh0, wih1], axis=1)
    bot = jnp.concatenate([jnp.zeros((H, 4 * H), f32), whh1], axis=1)
    wbig = jnp.concatenate([top, bot], axis=0).astype(bf16)  # (2H, 8H)

    w_out = params["w_out"].astype(f32)                      # (O, H)
    b_out = params["b_out"].astype(f32)                      # (O,)
    n_out = w_out.shape[0]
    o_pad = ((n_out + 127) // 128) * 128                     # lane-dense out
    wout = (jnp.zeros((H, o_pad), f32)
            .at[:, :n_out].set(jnp.transpose(w_out)).astype(bf16))
    bout = jnp.zeros((1, o_pad), f32).at[0, :n_out].set(b_out)

    return {"g0": g0, "wf0": wf0, "b0": b0, "wbig": wbig, "b1": b1,
            "wout": wout, "bout": bout, "n_out": n_out, "H": H}


# ----------------------------------------------------------------------------
# Model2 forward
# ----------------------------------------------------------------------------
def model2_forward(prep, x):
    """x: (B, T, 2) float32; x[..., 0] are token ids, x[..., 1] is a feature.

    Returns (B, T, 3), matching the PyTorch module's output (eval mode).
    """
    B, T, _ = x.shape
    H = prep["H"]
    V = prep["g0"].shape[0]
    OP = prep["wout"].shape[1]

    # Tiny time-major flattening glue at the kernel boundary.
    ids = jnp.transpose(x[:, :, 0]).astype(jnp.int32).reshape(T * B, 1)
    feat = jnp.transpose(x[:, :, 1]).astype(jnp.float32).reshape(T * B, 1)

    inputs = [ids, feat, prep["g0"], prep["wf0"], prep["b0"],
              prep["wbig"], prep["b1"], prep["wout"], prep["bout"]]

    kernel = functools.partial(_fused_forward_kernel, T=T, B=B, H=H, V=V)
    out_flat = pl.pallas_call(
        kernel,
        out_shape=jax.ShapeDtypeStruct((T * B, OP), jnp.float32),
        in_specs=[pl.BlockSpec(memory_space=pltpu.MemorySpace.VMEM)]
                 * len(inputs),
        out_specs=pl.BlockSpec(memory_space=pltpu.MemorySpace.VMEM),
    )(*inputs)

    out = out_flat.reshape(T, B, OP)[:, :, :prep["n_out"]]   # (T, B, 3)
    return jnp.transpose(out, (1, 0, 2))                     # (B, T, 3)


# ----------------------------------------------------------------------------
# Parameter init (matches the PyTorch module's shapes)
# ----------------------------------------------------------------------------
def init_params(key, vocab_sz, embed_dim, n_hidden, n_layers):
    keys = jax.random.split(key, 2 + 4 * n_layers)
    params = {
        "embedding": 0.1 * jax.random.normal(
            keys[0], (vocab_sz, embed_dim), jnp.float32),
        "w_out": 0.1 * jax.random.normal(
            keys[1], (3, n_hidden), jnp.float32),
        "b_out": jnp.zeros((3,), jnp.float32),
        "lstm": [],
    }
    for l in range(n_layers):
        din = (embed_dim + 1) if l == 0 else n_hidden
        k = keys[2 + 4 * l: 2 + 4 * (l + 1)]
        params["lstm"].append({
            "w_ih": 0.1 * jax.random.normal(k[0], (4 * n_hidden, din),
                                            jnp.float32),
            "w_hh": 0.1 * jax.random.normal(k[1], (4 * n_hidden, n_hidden),
                                            jnp.float32),
            "b_ih": 0.01 * jax.random.normal(k[2], (4 * n_hidden,),
                                             jnp.float32),
            "b_hh": 0.01 * jax.random.normal(k[3], (4 * n_hidden,),
                                             jnp.float32),
        })
    return params


if __name__ == "__main__":
    vocab_sz, embed_dim, n_hidden, n_layers = 32, 15, 32, 2
    B, T = 2, 8

    key = jax.random.PRNGKey(0)
    k_param, k_ids, k_feat = jax.random.split(key, 3)

    params = init_params(k_param, vocab_sz, embed_dim, n_hidden, n_layers)
    prep = prepare_params(params)

    ids = jax.random.randint(k_ids, (B, T), 0, vocab_sz).astype(jnp.float32)
    feat = jax.random.normal(k_feat, (B, T), jnp.float32)
    x = jnp.stack([ids, feat], axis=2)                        # (B, T, 2)

    fwd = jax.jit(lambda xx: model2_forward(prep, xx))
    out = jax.block_until_ready(fwd(x))
    assert out.shape == (B, T, 3), out.shape
    assert bool(jnp.all(jnp.isfinite(out)))
    print("KERNEL_OK")
</pallas_src>

<mosaic_0001>
module attributes {stable_mosaic.version = 11 : i64} {
  func.func @_fused_forward_kernel(%arg0: memref<16x1xi32, #tpu.memory_space<vmem>>, %arg1: memref<16x1xf32, #tpu.memory_space<vmem>>, %arg2: memref<32x128xbf16, #tpu.memory_space<vmem>>, %arg3: memref<1x128xf32, #tpu.memory_space<vmem>>, %arg4: memref<1x128xf32, #tpu.memory_space<vmem>>, %arg5: memref<64x256xbf16, #tpu.memory_space<vmem>>, %arg6: memref<1x128xf32, #tpu.memory_space<vmem>>, %arg7: memref<32x128xbf16, #tpu.memory_space<vmem>>, %arg8: memref<1x128xf32, #tpu.memory_space<vmem>>, %arg9: memref<16x128xf32, #tpu.memory_space<vmem>>) attributes {dimension_semantics = [], scalar_prefetch = 0 : i64, scratch_operands = 0 : i64, tpu.core_type = #tpu.core_type<tc>} {
    %c0 = arith.constant 0 : index
    %c0_0 = arith.constant 0 : index
    %0 = vector.load %arg0[%c0, %c0_0] : memref<16x1xi32, #tpu.memory_space<vmem>>, vector<16x1xi32>
    %1 = tpu.iota {dimensions = array<i32: 1>} : vector<16x32xi32>
    %2 = vector.broadcast %0 : vector<16x1xi32> to vector<16x32xi32>
    %3 = arith.cmpi eq, %2, %1 : vector<16x32xi32>
    %4 = arith.extui %3 : vector<16x32xi1> to vector<16x32xi32>
    %5 = arith.sitofp %4 : vector<16x32xi32> to vector<16x32xf32>
    %6 = arith.truncf %5 : vector<16x32xf32> to vector<16x32xbf16>
    %c0_1 = arith.constant 0 : index
    %c0_2 = arith.constant 0 : index
    %7 = vector.load %arg2[%c0_1, %c0_2] : memref<32x128xbf16, #tpu.memory_space<vmem>>, vector<32x128xbf16>
    %cst = arith.constant dense<0.000000e+00> : vector<16x128xf32>
    %8 = tpu.matmul %6, %7, %cst {dimension_numbers = #tpu.dot_dimension_numbers<[1], [0], [0], [1], [0, 0, 1, 1], [], []>} : vector<16x32xbf16>, vector<32x128xbf16>, vector<16x128xf32> -> vector<16x128xf32>
    %c0_3 = arith.constant 0 : index
    %c0_4 = arith.constant 0 : index
    %9 = vector.load %arg1[%c0_3, %c0_4] : memref<16x1xf32, #tpu.memory_space<vmem>>, vector<16x1xf32>
    %c0_5 = arith.constant 0 : index
    %c0_6 = arith.constant 0 : index
    %10 = vector.load %arg3[%c0_5, %c0_6] : memref<1x128xf32, #tpu.memory_space<vmem>>, vector<1x128xf32>
    %11 = vector.broadcast %9 : vector<16x1xf32> to vector<16x128xf32>
    %12 = vector.broadcast %10 : vector<1x128xf32> to vector<16x128xf32>
    %13 = arith.mulf %11, %12 : vector<16x128xf32>
    %14 = arith.addf %8, %13 : vector<16x128xf32>
    %c0_7 = arith.constant 0 : index
    %c0_8 = arith.constant 0 : index
    %15 = vector.load %arg4[%c0_7, %c0_8] : memref<1x128xf32, #tpu.memory_space<vmem>>, vector<1x128xf32>
    %16 = vector.broadcast %15 : vector<1x128xf32> to vector<16x128xf32>
    %17 = arith.addf %14, %16 : vector<16x128xf32>
    %18 = vector.extract_strided_slice %17 {offsets = [0, 0], sizes = [2, 128], strides = [1, 1]} : vector<16x128xf32> to vector<2x128xf32>
    %19 = vector.extract_strided_slice %17 {offsets = [2, 0], sizes = [2, 128], strides = [1, 1]} : vector<16x128xf32> to vector<2x128xf32>
    %20 = vector.extract_strided_slice %17 {offsets = [4, 0], sizes = [2, 128], strides = [1, 1]} : vector<16x128xf32> to vector<2x128xf32>
    %21 = vector.extract_strided_slice %17 {offsets = [6, 0], sizes = [2, 128], strides = [1, 1]} : vector<16x128xf32> to vector<2x128xf32>
    %22 = vector.extract_strided_slice %17 {offsets = [8, 0], sizes = [2, 128], strides = [1, 1]} : vector<16x128xf32> to vector<2x128xf32>
    %23 = vector.extract_strided_slice %17 {offsets = [10, 0], sizes = [2, 128], strides = [1, 1]} : vector<16x128xf32> to vector<2x128xf32>
    %24 = vector.extract_strided_slice %17 {offsets = [12, 0], sizes = [2, 128], strides = [1, 1]} : vector<16x128xf32> to vector<2x128xf32>
    %25 = vector.extract_strided_slice %17 {offsets = [14, 0], sizes = [2, 128], strides = [1, 1]} : vector<16x128xf32> to vector<2x128xf32>
    %c0_9 = arith.constant 0 : index
    %c0_10 = arith.constant 0 : index
    %26 = vector.load %arg5[%c0_9, %c0_10] : memref<64x256xbf16, #tpu.memory_space<vmem>>, vector<64x256xbf16>
    %c0_11 = arith.constant 0 : index
    %c0_12 = arith.constant 0 : index
    %27 = vector.load %arg6[%c0_11, %c0_12] : memref<1x128xf32, #tpu.memory_space<vmem>>, vector<1x128xf32>
    %cst_13 = arith.constant 0.000000e+00 : f32
    %28 = vector.broadcast %cst_13 : f32 to vector<2x32xf32>
    %cst_14 = arith.constant 0.000000e+00 : f32
    %29 = vector.broadcast %cst_14 : f32 to vector<2x32xf32>
    %cst_15 = arith.constant 0.000000e+00 : f32
    %30 = vector.broadcast %cst_15 : f32 to vector<2x32xf32>
    %31 = arith.negf %18 : vector<2x128xf32>
    %32 = math.exp %31 : vector<2x128xf32>
    %cst_16 = arith.constant 1.000000e+00 : f32
    %33 = vector.broadcast %cst_16 : f32 to vector<2x128xf32>
    %34 = arith.addf %33, %32 : vector<2x128xf32>
    %35 = arith.divf %33, %34 : vector<2x128xf32>
    %36 = math.tanh %18 : vector<2x128xf32>
    %37 = vector.extract_strided_slice %35 {offsets = [0, 0], sizes = [2, 32], strides = [1, 1]} : vector<2x128xf32> to vector<2x32xf32>
    %38 = vector.extract_strided_slice %35 {offsets = [0, 32], sizes = [2, 32], strides = [1, 1]} : vector<2x128xf32> to vector<2x32xf32>
    %39 = vector.extract_strided_slice %36 {offsets = [0, 64], sizes = [2, 32], strides = [1, 1]} : vector<2x128xf32> to vector<2x32xf32>
    %40 = vector.extract_strided_slice %35 {offsets = [0, 96], sizes = [2, 32], strides = [1, 1]} : vector<2x128xf32> to vector<2x32xf32>
    %41 = arith.mulf %38, %28 : vector<2x32xf32>
    %42 = arith.mulf %37, %39 : vector<2x32xf32>
    %43 = arith.addf %41, %42 : vector<2x32xf32>
    %44 = math.tanh %43 : vector<2x32xf32>
    %45 = arith.mulf %40, %44 : vector<2x32xf32>
    %46 = tpu.concatenate %45, %29 in 1 : vector<2x32xf32>, vector<2x32xf32> -> vector<2x64xf32>
    %47 = arith.truncf %46 : vector<2x64xf32> to vector<2x64xbf16>
    %cst_17 = arith.constant dense<0.000000e+00> : vector<2x256xf32>
    %48 = tpu.matmul %47, %26, %cst_17 {dimension_numbers = #tpu.dot_dimension_numbers<[1], [0], [0], [1], [0, 0, 1, 1], [], []>} : vector<2x64xbf16>, vector<64x256xbf16>, vector<2x256xf32> -> vector<2x256xf32>
    %49 = vector.extract_strided_slice %48 {offsets = [0, 0], sizes = [2, 128], strides = [1, 1]} : vector<2x256xf32> to vector<2x128xf32>
    %50 = arith.addf %19, %49 : vector<2x128xf32>
    %51 = vector.extract_strided_slice %48 {offsets = [0, 128], sizes = [2, 128], strides = [1, 1]} : vector<2x256xf32> to vector<2x128xf32>
    %52 = vector.broadcast %27 : vector<1x128xf32> to vector<2x128xf32>
    %53 = arith.addf %51, %52 : vector<2x128xf32>
    %54 = tpu.concatenate %50, %53 in 0 : vector<2x128xf32>, vector<2x128xf32> -> vector<4x128xf32>
    %55 = tpu.concatenate %43, %30 in 0 : vector<2x32xf32>, vector<2x32xf32> -> vector<4x32xf32>
    %56 = arith.negf %54 : vector<4x128xf32>
    %57 = math.exp %56 : vector<4x128xf32>
    %cst_18 = arith.constant 1.000000e+00 : f32
    %58 = vector.broadcast %cst_18 : f32 to vector<4x128xf32>
    %59 = arith.addf %58, %57 : vector<4x128xf32>
    %60 = arith.divf %58, %59 : vector<4x128xf32>
    %61 = math.tanh %54 : vector<4x128xf32>
    %62 = vector.extract_strided_slice %60 {offsets = [0, 0], sizes = [4, 32], strides = [1, 1]} : vector<4x128xf32> to vector<4x32xf32>
    %63 = vector.extract_strided_slice %60 {offsets = [0, 32], sizes = [4, 32], strides = [1, 1]} : vector<4x128xf32> to vector<4x32xf32>
    %64 = vector.extract_strided_slice %61 {offsets = [0, 64], sizes = [4, 32], strides = [1, 1]} : vector<4x128xf32> to vector<4x32xf32>
    %65 = vector.extract_strided_slice %60 {offsets = [0, 96], sizes = [4, 32], strides = [1, 1]} : vector<4x128xf32> to vector<4x32xf32>
    %66 = arith.mulf %63, %55 : vector<4x32xf32>
    %67 = arith.mulf %62, %64 : vector<4x32xf32>
    %68 = arith.addf %66, %67 : vector<4x32xf32>
    %69 = math.tanh %68 : vector<4x32xf32>
    %70 = arith.mulf %65, %69 : vector<4x32xf32>
    %71 = vector.extract_strided_slice %70 {offsets = [0, 0], sizes = [2, 32], strides = [1, 1]} : vector<4x32xf32> to vector<2x32xf32>
    %72 = vector.extract_strided_slice %68 {offsets = [0, 0], sizes = [2, 32], strides = [1, 1]} : vector<4x32xf32> to vector<2x32xf32>
    %73 = vector.extract_strided_slice %70 {offsets = [2, 0], sizes = [2, 32], strides = [1, 1]} : vector<4x32xf32> to vector<2x32xf32>
    %74 = vector.extract_strided_slice %68 {offsets = [2, 0], sizes = [2, 32], strides = [1, 1]} : vector<4x32xf32> to vector<2x32xf32>
    %75 = tpu.concatenate %71, %73 in 1 : vector<2x32xf32>, vector<2x32xf32> -> vector<2x64xf32>
    %76 = arith.truncf %75 : vector<2x64xf32> to vector<2x64xbf16>
    %cst_19 = arith.constant dense<0.000000e+00> : vector<2x256xf32>
    %77 = tpu.matmul %76, %26, %cst_19 {dimension_numbers = #tpu.dot_dimension_numbers<[1], [0], [0], [1], [0, 0, 1, 1], [], []>} : vector<2x64xbf16>, vector<64x256xbf16>, vector<2x256xf32> -> vector<2x256xf32>
    %78 = vector.extract_strided_slice %77 {offsets = [0, 0], sizes = [2, 128], strides = [1, 1]} : vector<2x256xf32> to vector<2x128xf32>
    %79 = arith.addf %20, %78 : vector<2x128xf32>
    %80 = vector.extract_strided_slice %77 {offsets = [0, 128], sizes = [2, 128], strides = [1, 1]} : vector<2x256xf32> to vector<2x128xf32>
    %81 = vector.broadcast %27 : vector<1x128xf32> to vector<2x128xf32>
    %82 = arith.addf %80, %81 : vector<2x128xf32>
    %83 = tpu.concatenate %79, %82 in 0 : vector<2x128xf32>, vector<2x128xf32> -> vector<4x128xf32>
    %84 = tpu.concatenate %72, %74 in 0 : vector<2x32xf32>, vector<2x32xf32> -> vector<4x32xf32>
    %85 = arith.negf %83 : vector<4x128xf32>
    %86 = math.exp %85 : vector<4x128xf32>
    %cst_20 = arith.constant 1.000000e+00 : f32
    %87 = vector.broadcast %cst_20 : f32 to vector<4x128xf32>
    %88 = arith.addf %87, %86 : vector<4x128xf32>
    %89 = arith.divf %87, %88 : vector<4x128xf32>
    %90 = math.tanh %83 : vector<4x128xf32>
    %91 = vector.extract_strided_slice %89 {offsets = [0, 0], sizes = [4, 32], strides = [1, 1]} : vector<4x128xf32> to vector<4x32xf32>
    %92 = vector.extract_strided_slice %89 {offsets = [0, 32], sizes = [4, 32], strides = [1, 1]} : vector<4x128xf32> to vector<4x32xf32>
    %93 = vector.extract_strided_slice %90 {offsets = [0, 64], sizes = [4, 32], strides = [1, 1]} : vector<4x128xf32> to vector<4x32xf32>
    %94 = vector.extract_strided_slice %89 {offsets = [0, 96], sizes = [4, 32], strides = [1, 1]} : vector<4x128xf32> to vector<4x32xf32>
    %95 = arith.mulf %92, %84 : vector<4x32xf32>
    %96 = arith.mulf %91, %93 : vector<4x32xf32>
    %97 = arith.addf %95, %96 : vector<4x32xf32>
    %98 = math.tanh %97 : vector<4x32xf32>
    %99 = arith.mulf %94, %98 : vector<4x32xf32>
    %100 = vector.extract_strided_slice %99 {offsets = [0, 0], sizes = [2, 32], strides = [1, 1]} : vector<4x32xf32> to vector<2x32xf32>
    %101 = vector.extract_strided_slice %97 {offsets = [0, 0], sizes = [2, 32], strides = [1, 1]} : vector<4x32xf32> to vector<2x32xf32>
    %102 = vector.extract_strided_slice %99 {offsets = [2, 0], sizes = [2, 32], strides = [1, 1]} : vector<4x32xf32> to vector<2x32xf32>
    %103 = vector.extract_strided_slice %97 {offsets = [2, 0], sizes = [2, 32], strides = [1, 1]} : vector<4x32xf32> to vector<2x32xf32>
    %104 = tpu.concatenate %100, %102 in 1 : vector<2x32xf32>, vector<2x32xf32> -> vector<2x64xf32>
    %105 = arith.truncf %104 : vector<2x64xf32> to vector<2x64xbf16>
    %cst_21 = arith.constant dense<0.000000e+00> : vector<2x256xf32>
    %106 = tpu.matmul %105, %26, %cst_21 {dimension_numbers = #tpu.dot_dimension_numbers<[1], [0], [0], [1], [0, 0, 1, 1], [], []>} : vector<2x64xbf16>, vector<64x256xbf16>, vector<2x256xf32> -> vector<2x256xf32>
    %107 = vector.extract_strided_slice %106 {offsets = [0, 0], sizes = [2, 128], strides = [1, 1]} : vector<2x256xf32> to vector<2x128xf32>
    %108 = arith.addf %21, %107 : vector<2x128xf32>
    %109 = vector.extract_strided_slice %106 {offsets = [0, 128], sizes = [2, 128], strides = [1, 1]} : vector<2x256xf32> to vector<2x128xf32>
    %110 = vector.broadcast %27 : vector<1x128xf32> to vector<2x128xf32>
    %111 = arith.addf %109, %110 : vector<2x128xf32>
    %112 = tpu.concatenate %108, %111 in 0 : vector<2x128xf32>, vector<2x128xf32> -> vector<4x128xf32>
    %113 = tpu.concatenate %101, %103 in 0 : vector<2x32xf32>, vector<2x32xf32> -> vector<4x32xf32>
    %114 = arith.negf %112 : vector<4x128xf32>
    %115 = math.exp %114 : vector<4x128xf32>
    %cst_22 = arith.constant 1.000000e+00 : f32
    %116 = vector.broadcast %cst_22 : f32 to vector<4x128xf32>
    %117 = arith.addf %116, %115 : vector<4x128xf32>
    %118 = arith.divf %116, %117 : vector<4x128xf32>
    %119 = math.tanh %112 : vector<4x128xf32>
    %120 = vector.extract_strided_slice %118 {offsets = [0, 0], sizes = [4, 32], strides = [1, 1]} : vector<4x128xf32> to vector<4x32xf32>
    %121 = vector.extract_strided_slice %118 {offsets = [0, 32], sizes = [4, 32], strides = [1, 1]} : vector<4x128xf32> to vector<4x32xf32>
    %122 = vector.extract_strided_slice %119 {offsets = [0, 64], sizes = [4, 32], strides = [1, 1]} : vector<4x128xf32> to vector<4x32xf32>
    %123 = vector.extract_strided_slice %118 {offsets = [0, 96], sizes = [4, 32], strides = [1, 1]} : vector<4x128xf32> to vector<4x32xf32>
    %124 = arith.mulf %121, %113 : vector<4x32xf32>
    %125 = arith.mulf %120, %122 : vector<4x32xf32>
    %126 = arith.addf %124, %125 : vector<4x32xf32>
    %127 = math.tanh %126 : vector<4x32xf32>
    %128 = arith.mulf %123, %127 : vector<4x32xf32>
    %129 = vector.extract_strided_slice %128 {offsets = [0, 0], sizes = [2, 32], strides = [1, 1]} : vector<4x32xf32> to vector<2x32xf32>
    %130 = vector.extract_strided_slice %126 {offsets = [0, 0], sizes = [2, 32], strides = [1, 1]} : vector<4x32xf32> to vector<2x32xf32>
    %131 = vector.extract_strided_slice %128 {offsets = [2, 0], sizes = [2, 32], strides = [1, 1]} : vector<4x32xf32> to vector<2x32xf32>
    %132 = vector.extract_strided_slice %126 {offsets = [2, 0], sizes = [2, 32], strides = [1, 1]} : vector<4x32xf32> to vector<2x32xf32>
    %133 = tpu.concatenate %129, %131 in 1 : vector<2x32xf32>, vector<2x32xf32> -> vector<2x64xf32>
    %134 = arith.truncf %133 : vector<2x64xf32> to vector<2x64xbf16>
    %cst_23 = arith.constant dense<0.000000e+00> : vector<2x256xf32>
    %135 = tpu.matmul %134, %26, %cst_23 {dimension_numbers = #tpu.dot_dimension_numbers<[1], [0], [0], [1], [0, 0, 1, 1], [], []>} : vector<2x64xbf16>, vector<64x256xbf16>, vector<2x256xf32> -> vector<2x256xf32>
    %136 = vector.extract_strided_slice %135 {offsets = [0, 0], sizes = [2, 128], strides = [1, 1]} : vector<2x256xf32> to vector<2x128xf32>
    %137 = arith.addf %22, %136 : vector<2x128xf32>
    %138 = vector.extract_strided_slice %135 {offsets = [0, 128], sizes = [2, 128], strides = [1, 1]} : vector<2x256xf32> to vector<2x128xf32>
    %139 = vector.broadcast %27 : vector<1x128xf32> to vector<2x128xf32>
    %140 = arith.addf %138, %139 : vector<2x128xf32>
    %141 = tpu.concatenate %137, %140 in 0 : vector<2x128xf32>, vector<2x128xf32> -> vector<4x128xf32>
    %142 = tpu.concatenate %130, %132 in 0 : vector<2x32xf32>, vector<2x32xf32> -> vector<4x32xf32>
    %143 = arith.negf %141 : vector<4x128xf32>
    %144 = math.exp %143 : vector<4x128xf32>
    %cst_24 = arith.constant 1.000000e+00 : f32
    %145 = vector.broadcast %cst_24 : f32 to vector<4x128xf32>
    %146 = arith.addf %145, %144 : vector<4x128xf32>
    %147 = arith.divf %145, %146 : vector<4x128xf32>
    %148 = math.tanh %141 : vector<4x128xf32>
    %149 = vector.extract_strided_slice %147 {offsets = [0, 0], sizes = [4, 32], strides = [1, 1]} : vector<4x128xf32> to vector<4x32xf32>
    %150 = vector.extract_strided_slice %147 {offsets = [0, 32], sizes = [4, 32], strides = [1, 1]} : vector<4x128xf32> to vector<4x32xf32>
    %151 = vector.extract_strided_slice %148 {offsets = [0, 64], sizes = [4, 32], strides = [1, 1]} : vector<4x128xf32> to vector<4x32xf32>
    %152 = vector.extract_strided_slice %147 {offsets = [0, 96], sizes = [4, 32], strides = [1, 1]} : vector<4x128xf32> to vector<4x32xf32>
    %153 = arith.mulf %150, %142 : vector<4x32xf32>
    %154 = arith.mulf %149, %151 : vector<4x32xf32>
    %155 = arith.addf %153, %154 : vector<4x32xf32>
    %156 = math.tanh %155 : vector<4x32xf32>
    %157 = arith.mulf %152, %156 : vector<4x32xf32>
    %158 = vector.extract_strided_slice %157 {offsets = [0, 0], sizes = [2, 32], strides = [1, 1]} : vector<4x32xf32> to vector<2x32xf32>
    %159 = vector.extract_strided_slice %155 {offsets = [0, 0], sizes = [2, 32], strides = [1, 1]} : vector<4x32xf32> to vector<2x32xf32>
    %160 = vector.extract_strided_slice %157 {offsets = [2, 0], sizes = [2, 32], strides = [1, 1]} : vector<4x32xf32> to vector<2x32xf32>
    %161 = vector.extract_strided_slice %155 {offsets = [2, 0], sizes = [2, 32], strides = [1, 1]} : vector<4x32xf32> to vector<2x32xf32>
    %162 = tpu.concatenate %158, %160 in 1 : vector<2x32xf32>, vector<2x32xf32> -> vector<2x64xf32>
    %163 = arith.truncf %162 : vector<2x64xf32> to vector<2x64xbf16>
    %cst_25 = arith.constant dense<0.000000e+00> : vector<2x256xf32>
    %164 = tpu.matmul %163, %26, %cst_25 {dimension_numbers = #tpu.dot_dimension_numbers<[1], [0], [0], [1], [0, 0, 1, 1], [], []>} : vector<2x64xbf16>, vector<64x256xbf16>, vector<2x256xf32> -> vector<2x256xf32>
    %165 = vector.extract_strided_slice %164 {offsets = [0, 0], sizes = [2, 128], strides = [1, 1]} : vector<2x256xf32> to vector<2x128xf32>
    %166 = arith.addf %23, %165 : vector<2x128xf32>
    %167 = vector.extract_strided_slice %164 {offsets = [0, 128], sizes = [2, 128], strides = [1, 1]} : vector<2x256xf32> to vector<2x128xf32>
    %168 = vector.broadcast %27 : vector<1x128xf32> to vector<2x128xf32>
    %169 = arith.addf %167, %168 : vector<2x128xf32>
    %170 = tpu.concatenate %166, %169 in 0 : vector<2x128xf32>, vector<2x128xf32> -> vector<4x128xf32>
    %171 = tpu.concatenate %159, %161 in 0 : vector<2x32xf32>, vector<2x32xf32> -> vector<4x32xf32>
    %172 = arith.negf %170 : vector<4x128xf32>
    %173 = math.exp %172 : vector<4x128xf32>
    %cst_26 = arith.constant 1.000000e+00 : f32
    %174 = vector.broadcast %cst_26 : f32 to vector<4x128xf32>
    %175 = arith.addf %174, %173 : vector<4x128xf32>
    %176 = arith.divf %174, %175 : vector<4x128xf32>
    %177 = math.tanh %170 : vector<4x128xf32>
    %178 = vector.extract_strided_slice %176 {offsets = [0, 0], sizes = [4, 32], strides = [1, 1]} : vector<4x128xf32> to vector<4x32xf32>
    %179 = vector.extract_strided_slice %176 {offsets = [0, 32], sizes = [4, 32], strides = [1, 1]} : vector<4x128xf32> to vector<4x32xf32>
    %180 = vector.extract_strided_slice %177 {offsets = [0, 64], sizes = [4, 32], strides = [1, 1]} : vector<4x128xf32> to vector<4x32xf32>
    %181 = vector.extract_strided_slice %176 {offsets = [0, 96], sizes = [4, 32], strides = [1, 1]} : vector<4x128xf32> to vector<4x32xf32>
    %182 = arith.mulf %179, %171 : vector<4x32xf32>
    %183 = arith.mulf %178, %180 : vector<4x32xf32>
    %184 = arith.addf %182, %183 : vector<4x32xf32>
    %185 = math.tanh %184 : vector<4x32xf32>
    %186 = arith.mulf %181, %185 : vector<4x32xf32>
    %187 = vector.extract_strided_slice %186 {offsets = [0, 0], sizes = [2, 32], strides = [1, 1]} : vector<4x32xf32> to vector<2x32xf32>
    %188 = vector.extract_strided_slice %184 {offsets = [0, 0], sizes = [2, 32], strides = [1, 1]} : vector<4x32xf32> to vector<2x32xf32>
    %189 = vector.extract_strided_slice %186 {offsets = [2, 0], sizes = [2, 32], strides = [1, 1]} : vector<4x32xf32> to vector<2x32xf32>
    %190 = vector.extract_strided_slice %184 {offsets = [2, 0], sizes = [2, 32], strides = [1, 1]} : vector<4x32xf32> to vector<2x32xf32>
    %191 = tpu.concatenate %187, %189 in 1 : vector<2x32xf32>, vector<2x32xf32> -> vector<2x64xf32>
    %192 = arith.truncf %191 : vector<2x64xf32> to vector<2x64xbf16>
    %cst_27 = arith.constant dense<0.000000e+00> : vector<2x256xf32>
    %193 = tpu.matmul %192, %26, %cst_27 {dimension_numbers = #tpu.dot_dimension_numbers<[1], [0], [0], [1], [0, 0, 1, 1], [], []>} : vector<2x64xbf16>, vector<64x256xbf16>, vector<2x256xf32> -> vector<2x256xf32>
    %194 = vector.extract_strided_slice %193 {offsets = [0, 0], sizes = [2, 128], strides = [1, 1]} : vector<2x256xf32> to vector<2x128xf32>
    %195 = arith.addf %24, %194 : vector<2x128xf32>
    %196 = vector.extract_strided_slice %193 {offsets = [0, 128], sizes = [2, 128], strides = [1, 1]} : vector<2x256xf32> to vector<2x128xf32>
    %197 = vector.broadcast %27 : vector<1x128xf32> to vector<2x128xf32>
    %198 = arith.addf %196, %197 : vector<2x128xf32>
    %199 = tpu.concatenate %195, %198 in 0 : vector<2x128xf32>, vector<2x128xf32> -> vector<4x128xf32>
    %200 = tpu.concatenate %188, %190 in 0 : vector<2x32xf32>, vector<2x32xf32> -> vector<4x32xf32>
    %201 = arith.negf %199 : vector<4x128xf32>
    %202 = math.exp %201 : vector<4x128xf32>
    %cst_28 = arith.constant 1.000000e+00 : f32
    %203 = vector.broadcast %cst_28 : f32 to vector<4x128xf32>
    %204 = arith.addf %203, %202 : vector<4x128xf32>
    %205 = arith.divf %203, %204 : vector<4x128xf32>
    %206 = math.tanh %199 : vector<4x128xf32>
    %207 = vector.extract_strided_slice %205 {offsets = [0, 0], sizes = [4, 32], strides = [1, 1]} : vector<4x128xf32> to vector<4x32xf32>
    %208 = vector.extract_strided_slice %205 {offsets = [0, 32], sizes = [4, 32], strides = [1, 1]} : vector<4x128xf32> to vector<4x32xf32>
    %209 = vector.extract_strided_slice %206 {offsets = [0, 64], sizes = [4, 32], strides = [1, 1]} : vector<4x128xf32> to vector<4x32xf32>
    %210 = vector.extract_strided_slice %205 {offsets = [0, 96], sizes = [4, 32], strides = [1, 1]} : vector<4x128xf32> to vector<4x32xf32>
    %211 = arith.mulf %208, %200 : vector<4x32xf32>
    %212 = arith.mulf %207, %209 : vector<4x32xf32>
    %213 = arith.addf %211, %212 : vector<4x32xf32>
    %214 = math.tanh %213 : vector<4x32xf32>
    %215 = arith.mulf %210, %214 : vector<4x32xf32>
    %216 = vector.extract_strided_slice %215 {offsets = [0, 0], sizes = [2, 32], strides = [1, 1]} : vector<4x32xf32> to vector<2x32xf32>
    %217 = vector.extract_strided_slice %213 {offsets = [0, 0], sizes = [2, 32], strides = [1, 1]} : vector<4x32xf32> to vector<2x32xf32>
    %218 = vector.extract_strided_slice %215 {offsets = [2, 0], sizes = [2, 32], strides = [1, 1]} : vector<4x32xf32> to vector<2x32xf32>
    %219 = vector.extract_strided_slice %213 {offsets = [2, 0], sizes = [2, 32], strides = [1, 1]} : vector<4x32xf32> to vector<2x32xf32>
    %220 = tpu.concatenate %216, %218 in 1 : vector<2x32xf32>, vector<2x32xf32> -> vector<2x64xf32>
    %221 = arith.truncf %220 : vector<2x64xf32> to vector<2x64xbf16>
    %cst_29 = arith.constant dense<0.000000e+00> : vector<2x256xf32>
    %222 = tpu.matmul %221, %26, %cst_29 {dimension_numbers = #tpu.dot_dimension_numbers<[1], [0], [0], [1], [0, 0, 1, 1], [], []>} : vector<2x64xbf16>, vector<64x256xbf16>, vector<2x256xf32> -> vector<2x256xf32>
    %223 = vector.extract_strided_slice %222 {offsets = [0, 0], sizes = [2, 128], strides = [1, 1]} : vector<2x256xf32> to vector<2x128xf32>
    %224 = arith.addf %25, %223 : vector<2x128xf32>
    %225 = vector.extract_strided_slice %222 {offsets = [0, 128], sizes = [2, 128], strides = [1, 1]} : vector<2x256xf32> to vector<2x128xf32>
    %226 = vector.broadcast %27 : vector<1x128xf32> to vector<2x128xf32>
    %227 = arith.addf %225, %226 : vector<2x128xf32>
    %228 = tpu.concatenate %224, %227 in 0 : vector<2x128xf32>, vector<2x128xf32> -> vector<4x128xf32>
    %229 = tpu.concatenate %217, %219 in 0 : vector<2x32xf32>, vector<2x32xf32> -> vector<4x32xf32>
    %230 = arith.negf %228 : vector<4x128xf32>
    %231 = math.exp %230 : vector<4x128xf32>
    %cst_30 = arith.constant 1.000000e+00 : f32
    %232 = vector.broadcast %cst_30 : f32 to vector<4x128xf32>
    %233 = arith.addf %232, %231 : vector<4x128xf32>
    %234 = arith.divf %232, %233 : vector<4x128xf32>
    %235 = math.tanh %228 : vector<4x128xf32>
    %236 = vector.extract_strided_slice %234 {offsets = [0, 0], sizes = [4, 32], strides = [1, 1]} : vector<4x128xf32> to vector<4x32xf32>
    %237 = vector.extract_strided_slice %234 {offsets = [0, 32], sizes = [4, 32], strides = [1, 1]} : vector<4x128xf32> to vector<4x32xf32>
    %238 = vector.extract_strided_slice %235 {offsets = [0, 64], sizes = [4, 32], strides = [1, 1]} : vector<4x128xf32> to vector<4x32xf32>
    %239 = vector.extract_strided_slice %234 {offsets = [0, 96], sizes = [4, 32], strides = [1, 1]} : vector<4x128xf32> to vector<4x32xf32>
    %240 = arith.mulf %237, %229 : vector<4x32xf32>
    %241 = arith.mulf %236, %238 : vector<4x32xf32>
    %242 = arith.addf %240, %241 : vector<4x32xf32>
    %243 = math.tanh %242 : vector<4x32xf32>
    %244 = arith.mulf %239, %243 : vector<4x32xf32>
    %245 = vector.extract_strided_slice %244 {offsets = [0, 0], sizes = [2, 32], strides = [1, 1]} : vector<4x32xf32> to vector<2x32xf32>
    %246 = vector.extract_strided_slice %244 {offsets = [2, 0], sizes = [2, 32], strides = [1, 1]} : vector<4x32xf32> to vector<2x32xf32>
    %247 = vector.extract_strided_slice %242 {offsets = [2, 0], sizes = [2, 32], strides = [1, 1]} : vector<4x32xf32> to vector<2x32xf32>
    %248 = tpu.concatenate %245, %246 in 1 : vector<2x32xf32>, vector<2x32xf32> -> vector<2x64xf32>
    %249 = arith.truncf %248 : vector<2x64xf32> to vector<2x64xbf16>
    %cst_31 = arith.constant dense<0.000000e+00> : vector<2x256xf32>
    %250 = tpu.matmul %249, %26, %cst_31 {dimension_numbers = #tpu.dot_dimension_numbers<[1], [0], [0], [1], [0, 0, 1, 1], [], []>} : vector<2x64xbf16>, vector<64x256xbf16>, vector<2x256xf32> -> vector<2x256xf32>
    %251 = vector.extract_strided_slice %250 {offsets = [0, 128], sizes = [2, 128], strides = [1, 1]} : vector<2x256xf32> to vector<2x128xf32>
    %252 = vector.broadcast %27 : vector<1x128xf32> to vector<2x128xf32>
    %253 = arith.addf %251, %252 : vector<2x128xf32>
    %254 = arith.negf %253 : vector<2x128xf32>
    %255 = math.exp %254 : vector<2x128xf32>
    %cst_32 = arith.constant 1.000000e+00 : f32
    %256 = vector.broadcast %cst_32 : f32 to vector<2x128xf32>
    %257 = arith.addf %256, %255 : vector<2x128xf32>
    %258 = arith.divf %256, %257 : vector<2x128xf32>
    %259 = math.tanh %253 : vector<2x128xf32>
    %260 = vector.extract_strided_slice %258 {offsets = [0, 0], sizes = [2, 32], strides = [1, 1]} : vector<2x128xf32> to vector<2x32xf32>
    %261 = vector.extract_strided_slice %258 {offsets = [0, 32], sizes = [2, 32], strides = [1, 1]} : vector<2x128xf32> to vector<2x32xf32>
    %262 = vector.extract_strided_slice %259 {offsets = [0, 64], sizes = [2, 32], strides = [1, 1]} : vector<2x128xf32> to vector<2x32xf32>
    %263 = vector.extract_strided_slice %258 {offsets = [0, 96], sizes = [2, 32], strides = [1, 1]} : vector<2x128xf32> to vector<2x32xf32>
    %264 = arith.mulf %261, %247 : vector<2x32xf32>
    %265 = arith.mulf %260, %262 : vector<2x32xf32>
    %266 = arith.addf %264, %265 : vector<2x32xf32>
    %267 = math.tanh %266 : vector<2x32xf32>
    %268 = arith.mulf %263, %267 : vector<2x32xf32>
    %269 = tpu.concatenate %73, %102, %131, %160, %189, %218, %246, %268 in 0 : vector<2x32xf32>, vector<2x32xf32>, vector<2x32xf32>, vector<2x32xf32>, vector<2x32xf32>, vector<2x32xf32>, vector<2x32xf32>, vector<2x32xf32> -> vector<16x32xf32>
    %270 = arith.truncf %269 : vector<16x32xf32> to vector<16x32xbf16>
    %c0_33 = arith.constant 0 : index
    %c0_34 = arith.constant 0 : index
    %271 = vector.load %arg7[%c0_33, %c0_34] : memref<32x128xbf16, #tpu.memory_space<vmem>>, vector<32x128xbf16>
    %cst_35 = arith.constant dense<0.000000e+00> : vector<16x128xf32>
    %272 = tpu.matmul %270, %271, %cst_35 {dimension_numbers = #tpu.dot_dimension_numbers<[1], [0], [0], [1], [0, 0, 1, 1], [], []>} : vector<16x32xbf16>, vector<32x128xbf16>, vector<16x128xf32> -> vector<16x128xf32>
    %c0_36 = arith.constant 0 : index
    %c0_37 = arith.constant 0 : index
    %273 = vector.load %arg8[%c0_36, %c0_37] : memref<1x128xf32, #tpu.memory_space<vmem>>, vector<1x128xf32>
    %274 = vector.broadcast %273 : vector<1x128xf32> to vector<16x128xf32>
    %275 = arith.addf %272, %274 : vector<16x128xf32>
    %c0_38 = arith.constant 0 : index
    %c0_39 = arith.constant 0 : index
    %276 = vector.load %arg9[%c0_38, %c0_39] : memref<16x128xf32, #tpu.memory_space<vmem>>, vector<16x128xf32>
    tpu.vector_store %arg9[%c0_38, %c0_39], %275 {strides = array<i32>} : memref<16x128xf32, #tpu.memory_space<vmem>>, vector<16x128xf32>,
    return
  }
}

</mosaic_0001>

<llo_original>
// kernel: _lambda_.1
$region0: #{_lambda_.1}
  #allocation0 [shape = 'u32[]', space=smem, size = 0x4, offset = 0x4, fixed_abs, tag = 'smem constant byte address 0x4 - core index']
  #allocation1 [shape = 'u32[72,128]{1,0:T(1,128)}', space=vmem, size = 0x9000, scoped, tag = 'internal scratch']
  %s0 = inlined_call_operand.vmem [shape: s32[16,1], index: 0, kind: input, shape index: {}]
  %s1 = inlined_call_operand.vmem [shape: f32[16,1], index: 1, kind: input, shape index: {}]
  %s2 = inlined_call_operand.hbm [shape: bf16[32,128], index: 2, kind: input, shape index: {}]
  %s3 = inlined_call_operand.vmem [shape: f32[1,128], index: 3, kind: input, shape index: {}]
  %s4 = inlined_call_operand.vmem [shape: f32[1,128], index: 4, kind: input, shape index: {}]
  %s5 = inlined_call_operand.vmem [shape: bf16[64,256], index: 5, kind: input, shape index: {}]
  %s6 = inlined_call_operand.vmem [shape: f32[1,128], index: 6, kind: input, shape index: {}]
  %s7 = inlined_call_operand.vmem [shape: bf16[32,128], index: 7, kind: input, shape index: {}]
  %s8 = inlined_call_operand.vmem [shape: f32[1,128], index: 8, kind: input, shape index: {}]
  %s9 = inlined_call_operand.vmem [shape: f32[16,128], index: 9, kind: output, shape index: {}]
  %s10 = sld [smem:[#allocation0]]
  $region50: #{_lambda_.1} parent=0
    _
  %s12 = ssub.s32 1, %s10
  %s13 = scalar_select 0, %s12, %s10
  $region1: #{_lambda_.1} parent=0
    #allocation2 [shape = 'u8[8192]{0}', space=vmem, size = 0x2000, scoped, tag = 'input window, operand 2, single buffered']
    #allocation3 [shape = 's32[1]{0}', space=sflag, size = 0x4, scoped, tag = 'scoped memory for _lambda_.1']
    %14 = vsyncpa [#allocation3], 0
    // Predicated region
    $region2: #{_lambda_.1} parent=1 // pred_check
      _
    $region3: #{_lambda_.1} parent=1 // pred_check_branch
      %16 = sbr.rel (0) target = $region5
    $region4: #{_lambda_.1} parent=1 // pred_region
      _
    $region5: #{_lambda_.1} parent=1 // pred_fallthru
      _
    // Predicated region
    $region6: #{_lambda_.1} parent=1 // pred_check
      _
    $region7: #{_lambda_.1} parent=1 // pred_check_branch
      %18 = sbr.rel (0) target = $region9
    $region8: #{_lambda_.1} parent=1 // pred_region
      _
    $region9: #{_lambda_.1} parent=1 // pred_fallthru
      _
    // Predicated region
    $region10: #{_lambda_.1} parent=1 // pred_check
      _
    $region11: #{_lambda_.1} parent=1 // pred_check_branch
      %20 = sbr.rel (0) target = $region13
    $region12: #{_lambda_.1} parent=1 // pred_region
      %22 = vsyncadd [#allocation3], 0
      %s23 = sshll.u32 %s2, 4
      %s24 = int_to_ptr.hbm [resolvable:$true] %s23
      %s25 = sshll.u32 [#allocation2], 4
      %s26 = int_to_ptr.vmem [resolvable:$true] %s25
      %31 = dma.hbm_to_vmem [thread:$0]  %s24, 256, %s26, [#allocation3], 64, 64, 4
    $region13: #{_lambda_.1} parent=1 // pred_fallthru
      _
    // Predicated region
    $region14: #{_lambda_.1} parent=1 // pred_check
      _
    $region15: #{_lambda_.1} parent=1 // pred_check_branch
      %33 = sbr.rel (0) target = $region17
    $region16: #{_lambda_.1} parent=1 // pred_region
      _
    $region17: #{_lambda_.1} parent=1 // pred_fallthru
      _
    // Predicated region
    $region18: #{_lambda_.1} parent=1 // pred_check
      _
    $region19: #{_lambda_.1} parent=1 // pred_check_branch
      %35 = sbr.rel (0) target = $region21
    $region20: #{_lambda_.1} parent=1 // pred_region
      _
    $region21: #{_lambda_.1} parent=1 // pred_fallthru
      _
    // Predicated region
    $region22: #{_lambda_.1} parent=1 // pred_check
      _
    $region23: #{_lambda_.1} parent=1 // pred_check_branch
      %37 = sbr.rel (0) target = $region25
    $region24: #{_lambda_.1} parent=1 // pred_region
      _
    $region25: #{_lambda_.1} parent=1 // pred_fallthru
      _
    // Predicated region
    $region26: #{_lambda_.1} parent=1 // pred_check
      _
    $region27: #{_lambda_.1} parent=1 // pred_check_branch
      %39 = sbr.rel (0) target = $region29
    $region28: #{_lambda_.1} parent=1 // pred_region
      _
    $region29: #{_lambda_.1} parent=1 // pred_fallthru
      _
    // Predicated region
    $region30: #{_lambda_.1} parent=1 // pred_check
      _
    $region31: #{_lambda_.1} parent=1 // pred_check_branch
      %41 = sbr.rel (0) target = $region33
    $region32: #{_lambda_.1} parent=1 // pred_region
      _
    $region33: #{_lambda_.1} parent=1 // pred_fallthru
      _
    // Predicated region
    $region34: #{_lambda_.1} parent=1 // pred_check
      _
    $region35: #{_lambda_.1} parent=1 // pred_check_branch
      %43 = sbr.rel (0) target = $region37
    $region36: #{_lambda_.1} parent=1 // pred_region
      _
    $region37: #{_lambda_.1} parent=1 // pred_fallthru
      _
    // Predicated region
    $region38: #{_lambda_.1} parent=1 // pred_check
      _
    $region39: #{_lambda_.1} parent=1 // pred_check_branch
      %45 = sbr.rel (0) target = $region41
    $region40: #{_lambda_.1} parent=1 // pred_region
      %47 = dma.done [#allocation3], 256
    $region41: #{_lambda_.1} parent=1 // pred_fallthru
      _
    %v49 = vld [vmem:[%s0] sm:$0xff]
    %v50 = vld [vmem:[%s0 + $0x8] sm:$0xff]
    %v51 = vlaneseq
    %v52 = vand.u32 %v51, 127
    %53 = vset.pattern.permute.xlu0 0
    %54 = vperm.xlu0 %53, %v49
    %v55 = vpop.permute.xlu0 %54
    %56 = vset.pattern.permute.xlu0 0
    %57 = vperm.xlu0 %56, %v50
    %v58 = vpop.permute.xlu0 %57
    %vm59 = vcmp.eq.s32.totalorder %v55, %v52
    %vm60 = vcmp.eq.s32.totalorder %v58, %v52
    %v61 = vsel %vm59, 1, 0
    %v62 = vsel %vm60, 1, 0
    %v63 = vcvt.s32.f32 %v61
    %v64 = vcvt.s32.f32 %v62
    %v65 = vpack.c.bf16 %v64, %v63
    %v66 = vld [vmem:[#allocation2] sm:$0xf]
    %v67 = vld [vmem:[#allocation2 + $0x4] sm:$0xf]
    %v68 = vld [vmem:[#allocation2 + $0x8] sm:$0xf]
    %v69 = vld [vmem:[#allocation2 + $0xc] sm:$0xf]
    %v70 = vld [vmem:[%s1] sm:$0xff]
    %v71 = vld [vmem:[%s1 + $0x8] sm:$0xff]
    %v72 = vld [vmem:[%s3] sm:$0x1]
    %74 = vset.pattern.permute.xlu0 0
    %75 = vperm.xlu0 %74, %v70
    %v76 = vpop.permute.xlu0 %75
    %79 = vset.pattern.permute.xlu0 0
    %80 = vperm.xlu0 %79, %v71
    %v81 = vpop.permute.xlu0 %80
    %v84 = vperm.slane %v72, 0
    %v86 = vmul.f32 %v76, %v84
    %v87 = vmul.f32 %v81, %v84
    %v92 = vunpack.c.l.b16 %v66
    %v93 = vunpack.c.l.b16 %v67
    %v94 = vunpack.c.l.b16 %v68
    %v95 = vunpack.c.l.b16 %v69
    %v96 = vpack.c.b16 %v93, %v92
    %v97 = vpack.c.b16 %v95, %v94
    %vm100 = vcmask 261120
    %v102 = vsel %vm100, %v65, 0
    %104 = vmatpush.bf16.msra.mxu0 0
    %105 = vmatpush.bf16.msra.mxu0 0
    %106 = vmatpush.bf16.msra.mxu0 0
    %107 = vmatpush.bf16.msra.mxu0 0
    %108 = vmatpush.bf16.msra.mxu0 0
    %109 = vmatpush.bf16.msra.mxu0 0
    %110 = vmatpush.bf16.msra.mxu0 %v97
    %111 = vmatpush.bf16.msra.mxu0 %v96
    %112 = vmatmul.bf16.gmra.mxu0 %v102
    %v113 = vpop.f32.mrf.mxu0
    %v114 = vadd.f32 %v86, %v113
    %v115 = vpop.f32.mrf.mxu0
    %v116 = vadd.f32 %v87, %v115
    %117 = vdwg.mxu0
    %v118 = vld [vmem:[%s4] sm:$0x1]
    %v120 = vperm.slane %v118, 0
    %v122 = vadd.f32 %v114, %v120
    %v123 = vadd.f32 %v116, %v120
    %v124 = vld [vmem:[%s5] sm:$0xff]
    %v125 = vld [vmem:[%s5 + $0x8] sm:$0xff]
    %v126 = vld [vmem:[%s5 + $0x10] sm:$0xff]
    %v127 = vld [vmem:[%s5 + $0x18] sm:$0xff]
    %v128 = vld [vmem:[%s5 + $0x20] sm:$0xff]
    %v129 = vld [vmem:[%s5 + $0x28] sm:$0xff]
    %v130 = vld [vmem:[%s5 + $0x30] sm:$0xff]
    %v131 = vld [vmem:[%s5 + $0x38] sm:$0xff]
    %v132 = vld [vmem:[%s6] sm:$0x1]
    %v133 = vxor.u32 %v122, 2147483648
    %v134 = vmul.f32 %v133, 1.442695
    %v135 = vpow.pop %v134
    %v136 = vadd.f32 %v135, 1.0
    %v137 = vrcp.pop %v136
    %v138 = vmul.f32 %v136, %v137
    %v139 = vsub.f32 1.0, %v138
    %v140 = vmul.f32 %v137, %v139
    %v141 = vadd.f32 %v137, %v140
    %vm142 = vweird.f32 %v136
    %vm143 = vweird.f32 %v137
    %vm144 = vmor %vm142, %vm143
    %v145 = vsel %vm144, %v137, %v141
    %v146 = vand.u32 2147483647, %v136
    %vm147 = vcmp.eq.f32.partialorder %v146, 8.507059e+37
    %v148 = vand.u32 %v136, 2147483648
    %v149 = vor.u32 1.1754944e-38, %v148
    %v150 = vsel %vm147, %v149, %v145
    %v151 = vmul.f32 1.0, %v150
    %v152 = vtanh.pop %v122
    %v153 = vmul.f32 %v151, 0.0
    %155 = vrot.lane.b32.xlu0 %v152, 64
    %v156 = vpop.permute.xlu0 %155
    %v158 = vmul.f32 %v151, %v156
    %160 = vrot.lane.b32.xlu0 %v158, 32
    %v161 = vpop.permute.xlu0 %160
    %v163 = vadd.f32 %v153, %v161
    %v164 = vtanh.pop %v163
    %166 = vrot.lane.b32.xlu0 %v164, 64
    %v167 = vpop.permute.xlu0 %166
    %v169 = vmul.f32 %v151, %v167
    %171 = vrot.lane.b32.xlu0 %v169, 32
    %v172 = vpop.permute.xlu0 %171
    %v174 = vsel %vm100, %v172, 0.0
    %v175 = vpack.c.bf16 %v174, %v174
    %v184 = vunpack.c.l.b16 %v124
    %v185 = vunpack.c.h.b16 %v124
    %v186 = vunpack.c.l.b16 %v125
    %v187 = vunpack.c.h.b16 %v125
    %v188 = vunpack.c.l.b16 %v126
    %v189 = vunpack.c.h.b16 %v126
    %v190 = vunpack.c.l.b16 %v127
    %v191 = vunpack.c.h.b16 %v127
    %v192 = vunpack.c.l.b16 %v128
    %v193 = vunpack.c.h.b16 %v128
    %v194 = vunpack.c.l.b16 %v129
    %v195 = vunpack.c.h.b16 %v129
    %v196 = vunpack.c.l.b16 %v130
    %v197 = vunpack.c.h.b16 %v130
    %v198 = vunpack.c.l.b16 %v131
    %v199 = vunpack.c.h.b16 %v131
    %v200 = vpack.c.b16 %v186, %v184
    %v201 = vpack.c.b16 %v187, %v185
    %v202 = vpack.c.b16 %v190, %v188
    %v203 = vpack.c.b16 %v191, %v189
    %v204 = vpack.c.b16 %v194, %v192
    %v205 = vpack.c.b16 %v195, %v193
    %v206 = vpack.c.b16 %v198, %v196
    %v207 = vpack.c.b16 %v199, %v197
    %vm216 = vcmask 523264
    %v218 = vsel %vm216, %v175, 0
    %220 = vmatpush.bf16.msra.mxu0 0
    %221 = vmatpush.bf16.msra.mxu0 0
    %222 = vmatpush.bf16.msra.mxu0 0
    %223 = vmatpush.bf16.msra.mxu0 0
    %224 = vmatpush.bf16.msra.mxu0 %v206
    %225 = vmatpush.bf16.msra.mxu0 %v204
    %226 = vmatpush.bf16.msra.mxu0 %v202
    %227 = vmatpush.bf16.msra.mxu0 %v200
    %228 = vmatmul.bf16.gmra.mxu0 %v218
    %v229 = vpop.f32.mrf.mxu0
    %v230 = vadd.f32 0.0, %v229
    %v231 = vpop.f32.mrf.mxu0
    %232 = vdwg.mxu0
    %233 = vmatpush.bf16.msra.mxu0 0
    %234 = vmatpush.bf16.msra.mxu0 0
    %235 = vmatpush.bf16.msra.mxu0 0
    %236 = vmatpush.bf16.msra.mxu0 0
    %237 = vmatpush.bf16.msra.mxu0 %v207
    %238 = vmatpush.bf16.msra.mxu0 %v205
    %239 = vmatpush.bf16.msra.mxu0 %v203
    %240 = vmatpush.bf16.msra.mxu0 %v201
    %241 = vmatmul.bf16.gmra.mxu0 %v218
    %v242 = vpop.f32.mrf.mxu0
    %v243 = vadd.f32 0.0, %v242
    %v244 = vpop.f32.mrf.mxu0
    %245 = vdwg.mxu0
    %v247 = vrot.slane %v230, 6
    %v249 = vadd.f32 %v122, %v247
    %v251 = vperm.slane %v132, 0
    %v253 = vadd.f32 %v243, %v251
    %v255 = vrot.slane %v249, 2
    %v258 = vrot.slane %v253, 6
    %vm260 = vcmask 1041408
    %v261 = vsel %vm260, %v255, %v258
    %v262 = vsel %vm260, %v163, 0.0
    %v263 = vxor.u32 %v261, 2147483648
    %v264 = vmul.f32 %v263, 1.442695
    %v265 = vpow.pop %v264
    %v266 = vadd.f32 %v265, 1.0
    %v267 = vrcp.pop %v266
    %v268 = vmul.f32 %v266, %v267
    %v269 = vsub.f32 1.0, %v268
    %v270 = vmul.f32 %v267, %v269
    %v271 = vadd.f32 %v267, %v270
    %vm272 = vweird.f32 %v266
    %vm273 = vweird.f32 %v267
    %vm274 = vmor %vm272, %vm273
    %v275 = vsel %vm274, %v267, %v271
    %v276 = vand.u32 2147483647, %v266
    %vm277 = vcmp.eq.f32.partialorder %v276, 8.507059e+37
    %v278 = vand.u32 %v266, 2147483648
    %v279 = vor.u32 1.1754944e-38, %v278
    %v280 = vsel %vm277, %v279, %v275
    %v281 = vmul.f32 1.0, %v280
    %v282 = vtanh.pop %v261
    %v283 = vmul.f32 %v281, %v262
    %285 = vrot.lane.b32.xlu0 %v282, 64
    %v286 = vpop.permute.xlu0 %285
    %v288 = vmul.f32 %v281, %v286
    %290 = vrot.lane.b32.xlu0 %v288, 32
    %v291 = vpop.permute.xlu0 %290
    %v293 = vadd.f32 %v283, %v291
    %v294 = vtanh.pop %v293
    %296 = vrot.lane.b32.xlu0 %v294, 64
    %v297 = vpop.permute.xlu0 %296
    %v299 = vmul.f32 %v281, %v297
    %301 = vrot.lane.b32.xlu0 %v299, 32
    %v302 = vpop.permute.xlu0 %301
    %v304 = vrot.slane %v299, 2
    %305 = vrot.lane.b32.xlu0 %v304, 64
    %v306 = vpop.permute.xlu0 %305
    %v308 = vsel %vm100, %v302, %v306
    %v309 = vpack.c.bf16 %v308, %v308
    %v311 = vsel %vm216, %v309, 0
    %313 = vmatpush.bf16.msra.mxu0 0
    %314 = vmatpush.bf16.msra.mxu0 0
    %315 = vmatpush.bf16.msra.mxu0 0
    %316 = vmatpush.bf16.msra.mxu0 0
    %317 = vmatpush.bf16.msra.mxu0 %v206
    %318 = vmatpush.bf16.msra.mxu0 %v204
    %319 = vmatpush.bf16.msra.mxu0 %v202
    %320 = vmatpush.bf16.msra.mxu0 %v200
    %321 = vmatmul.bf16.gmra.mxu0 %v311
    %v322 = vpop.f32.mrf.mxu0
    %v323 = vadd.f32 0.0, %v322
    %v324 = vpop.f32.mrf.mxu0
    %325 = vdwg.mxu0
    %326 = vmatpush.bf16.msra.mxu0 0
    %327 = vmatpush.bf16.msra.mxu0 0
    %328 = vmatpush.bf16.msra.mxu0 0
    %329 = vmatpush.bf16.msra.mxu0 0
    %330 = vmatpush.bf16.msra.mxu0 %v207
    %331 = vmatpush.bf16.msra.mxu0 %v205
    %332 = vmatpush.bf16.msra.mxu0 %v203
    %333 = vmatpush.bf16.msra.mxu0 %v201
    %334 = vmatmul.bf16.gmra.mxu0 %v311
    %v335 = vpop.f32.mrf.mxu0
    %v336 = vadd.f32 0.0, %v335
    %v337 = vpop.f32.mrf.mxu0
    %338 = vdwg.mxu0
    %v340 = vrot.slane %v323, 4
    %v342 = vadd.f32 %v122, %v340
    %v343 = vadd.f32 %v336, %v251
    %v345 = vrot.slane %v342, 4
    %v348 = vrot.slane %v343, 6
    %v350 = vsel %vm260, %v345, %v348
    %v351 = vxor.u32 %v350, 2147483648
    %v352 = vmul.f32 %v351, 1.442695
    %v353 = vpow.pop %v352
    %v354 = vadd.f32 %v353, 1.0
    %v355 = vrcp.pop %v354
    %v356 = vmul.f32 %v354, %v355
    %v357 = vsub.f32 1.0, %v356
    %v358 = vmul.f32 %v355, %v357
    %v359 = vadd.f32 %v355, %v358
    %vm360 = vweird.f32 %v354
    %vm361 = vweird.f32 %v355
    %vm362 = vmor %vm360, %vm361
    %v363 = vsel %vm362, %v355, %v359
    %v364 = vand.u32 2147483647, %v354
    %vm365 = vcmp.eq.f32.partialorder %v364, 8.507059e+37
    %v366 = vand.u32 %v354, 2147483648
    %v367 = vor.u32 1.1754944e-38, %v366
    %v368 = vsel %vm365, %v367, %v363
    %v369 = vmul.f32 1.0, %v368
    %v370 = vtanh.pop %v350
    %v371 = vmul.f32 %v369, %v293
    %373 = vrot.lane.b32.xlu0 %v370, 64
    %v374 = vpop.permute.xlu0 %373
    %v376 = vmul.f32 %v369, %v374
    %378 = vrot.lane.b32.xlu0 %v376, 32
    %v379 = vpop.permute.xlu0 %378
    %v381 = vadd.f32 %v371, %v379
    %v382 = vtanh.pop %v381
    %384 = vrot.lane.b32.xlu0 %v382, 64
    %v385 = vpop.permute.xlu0 %384
    %v387 = vmul.f32 %v369, %v385
    %389 = vrot.lane.b32.xlu0 %v387, 32
    %v390 = vpop.permute.xlu0 %389
    %v392 = vrot.slane %v387, 2
    %393 = vrot.lane.b32.xlu0 %v392, 64
    %v394 = vpop.permute.xlu0 %393
    %v396 = vsel %vm100, %v390, %v394
    %v397 = vpack.c.bf16 %v396, %v396
    %v399 = vsel %vm216, %v397, 0
    %401 = vmatpush.bf16.msra.mxu0 0
    %402 = vmatpush.bf16.msra.mxu0 0
    %403 = vmatpush.bf16.msra.mxu0 0
    %404 = vmatpush.bf16.msra.mxu0 0
    %405 = vmatpush.bf16.msra.mxu0 %v206
    %406 = vmatpush.bf16.msra.mxu0 %v204
    %407 = vmatpush.bf16.msra.mxu0 %v202
    %408 = vmatpush.bf16.msra.mxu0 %v200
    %409 = vmatmul.bf16.gmra.mxu0 %v399
    %v410 = vpop.f32.mrf.mxu0
    %v411 = vadd.f32 0.0, %v410
    %v412 = vpop.f32.mrf.mxu0
    %413 = vdwg.mxu0
    %414 = vmatpush.bf16.msra.mxu0 0
    %415 = vmatpush.bf16.msra.mxu0 0
    %416 = vmatpush.bf16.msra.mxu0 0
    %417 = vmatpush.bf16.msra.mxu0 0
    %418 = vmatpush.bf16.msra.mxu0 %v207
    %419 = vmatpush.bf16.msra.mxu0 %v205
    %420 = vmatpush.bf16.msra.mxu0 %v203
    %421 = vmatpush.bf16.msra.mxu0 %v201
    %422 = vmatmul.bf16.gmra.mxu0 %v399
    %v423 = vpop.f32.mrf.mxu0
    %v424 = vadd.f32 0.0, %v423
    %v425 = vpop.f32.mrf.mxu0
    %426 = vdwg.mxu0
    %v428 = vrot.slane %v411, 2
    %v430 = vadd.f32 %v122, %v428
    %v431 = vadd.f32 %v424, %v251
    %v433 = vrot.slane %v430, 6
    %v436 = vrot.slane %v431, 6
    %v438 = vsel %vm260, %v433, %v436
    %v439 = vxor.u32 %v438, 2147483648
    %v440 = vmul.f32 %v439, 1.442695
    %v441 = vpow.pop %v440
    %v442 = vadd.f32 %v441, 1.0
    %v443 = vrcp.pop %v442
    %v444 = vmul.f32 %v442, %v443
    %v445 = vsub.f32 1.0, %v444
    %v446 = vmul.f32 %v443, %v445
    %v447 = vadd.f32 %v443, %v446
    %vm448 = vweird.f32 %v442
    %vm449 = vweird.f32 %v443
    %vm450 = vmor %vm448, %vm449
    %v451 = vsel %vm450, %v443, %v447
    %v452 = vand.u32 2147483647, %v442
    %vm453 = vcmp.eq.f32.partialorder %v452, 8.507059e+37
    %v454 = vand.u32 %v442, 2147483648
    %v455 = vor.u32 1.1754944e-38, %v454
    %v456 = vsel %vm453, %v455, %v451
    %v457 = vmul.f32 1.0, %v456
    %v458 = vtanh.pop %v438
    %v459 = vmul.f32 %v457, %v381
    %461 = vrot.lane.b32.xlu0 %v458, 64
    %v462 = vpop.permute.xlu0 %461
    %v464 = vmul.f32 %v457, %v462
    %466 = vrot.lane.b32.xlu0 %v464, 32
    %v467 = vpop.permute.xlu0 %466
    %v469 = vadd.f32 %v459, %v467
    %v470 = vtanh.pop %v469
    %472 = vrot.lane.b32.xlu0 %v470, 64
    %v473 = vpop.permute.xlu0 %472
    %v475 = vmul.f32 %v457, %v473
    %477 = vrot.lane.b32.xlu0 %v475, 32
    %v478 = vpop.permute.xlu0 %477
    %v480 = vrot.slane %v475, 2
    %481 = vrot.lane.b32.xlu0 %v480, 64
    %v482 = vpop.permute.xlu0 %481
    %v484 = vsel %vm100, %v478, %v482
    %v485 = vpack.c.bf16 %v484, %v484
    %v487 = vsel %vm216, %v485, 0
    %489 = vmatpush.bf16.msra.mxu0 0
    %490 = vmatpush.bf16.msra.mxu0 0
    %491 = vmatpush.bf16.msra.mxu0 0
    %492 = vmatpush.bf16.msra.mxu0 0
    %493 = vmatpush.bf16.msra.mxu0 %v206
    %494 = vmatpush.bf16.msra.mxu0 %v204
    %495 = vmatpush.bf16.msra.mxu0 %v202
    %496 = vmatpush.bf16.msra.mxu0 %v200
    %497 = vmatmul.bf16.gmra.mxu0 %v487
    %v498 = vpop.f32.mrf.mxu0
    %v499 = vadd.f32 0.0, %v498
    %v500 = vpop.f32.mrf.mxu0
    %501 = vdwg.mxu0
    %502 = vmatpush.bf16.msra.mxu0 0
    %503 = vmatpush.bf16.msra.mxu0 0
    %504 = vmatpush.bf16.msra.mxu0 0
    %505 = vmatpush.bf16.msra.mxu0 0
    %506 = vmatpush.bf16.msra.mxu0 %v207
    %507 = vmatpush.bf16.msra.mxu0 %v205
    %508 = vmatpush.bf16.msra.mxu0 %v203
    %509 = vmatpush.bf16.msra.mxu0 %v201
    %510 = vmatmul.bf16.gmra.mxu0 %v487
    %v511 = vpop.f32.mrf.mxu0
    %v512 = vadd.f32 0.0, %v511
    %v513 = vpop.f32.mrf.mxu0
    %514 = vdwg.mxu0
    %v515 = vadd.f32 %v123, %v499
    %v516 = vadd.f32 %v512, %v251
    %v518 = vrot.slane %v516, 6
    %v520 = vsel %vm260, %v515, %v518
    %v521 = vxor.u32 %v520, 2147483648
    %v522 = vmul.f32 %v521, 1.442695
    %v523 = vpow.pop %v522
    %v524 = vadd.f32 %v523, 1.0
    %v525 = vrcp.pop %v524
    %v526 = vmul.f32 %v524, %v525
    %v527 = vsub.f32 1.0, %v526
    %v528 = vmul.f32 %v525, %v527
    %v529 = vadd.f32 %v525, %v528
    %vm530 = vweird.f32 %v524
    %vm531 = vweird.f32 %v525
    %vm532 = vmor %vm530, %vm531
    %v533 = vsel %vm532, %v525, %v529
    %v534 = vand.u32 2147483647, %v524
    %vm535 = vcmp.eq.f32.partialorder %v534, 8.507059e+37
    %v536 = vand.u32 %v524, 2147483648
    %v537 = vor.u32 1.1754944e-38, %v536
    %v538 = vsel %vm535, %v537, %v533
    %v539 = vmul.f32 1.0, %v538
    %v540 = vtanh.pop %v520
    %v541 = vmul.f32 %v539, %v469
    %543 = vrot.lane.b32.xlu0 %v540, 64
    %v544 = vpop.permute.xlu0 %543
    %v546 = vmul.f32 %v539, %v544
    %548 = vrot.lane.b32.xlu0 %v546, 32
    %v549 = vpop.permute.xlu0 %548
    %v551 = vadd.f32 %v541, %v549
    %v552 = vtanh.pop %v551
    %554 = vrot.lane.b32.xlu0 %v552, 64
    %v555 = vpop.permute.xlu0 %554
    %v557 = vmul.f32 %v539, %v555
    %559 = vrot.lane.b32.xlu0 %v557, 32
    %v560 = vpop.permute.xlu0 %559
    %v562 = vrot.slane %v557, 2
    %563 = vrot.lane.b32.xlu0 %v562, 64
    %v564 = vpop.permute.xlu0 %563
    %v566 = vsel %vm100, %v560, %v564
    %v567 = vpack.c.bf16 %v566, %v566
    %v569 = vsel %vm216, %v567, 0
    %571 = vmatpush.bf16.msra.mxu0 0
    %572 = vmatpush.bf16.msra.mxu0 0
    %573 = vmatpush.bf16.msra.mxu0 0
    %574 = vmatpush.bf16.msra.mxu0 0
    %575 = vmatpush.bf16.msra.mxu0 %v206
    %576 = vmatpush.bf16.msra.mxu0 %v204
    %577 = vmatpush.bf16.msra.mxu0 %v202
    %578 = vmatpush.bf16.msra.mxu0 %v200
    %579 = vmatmul.bf16.gmra.mxu0 %v569
    %v580 = vpop.f32.mrf.mxu0
    %v581 = vadd.f32 0.0, %v580
    %v582 = vpop.f32.mrf.mxu0
    %583 = vdwg.mxu0
    %584 = vmatpush.bf16.msra.mxu0 0
    %585 = vmatpush.bf16.msra.mxu0 0
    %586 = vmatpush.bf16.msra.mxu0 0
    %587 = vmatpush.bf16.msra.mxu0 0
    %588 = vmatpush.bf16.msra.mxu0 %v207
    %589 = vmatpush.bf16.msra.mxu0 %v205
    %590 = vmatpush.bf16.msra.mxu0 %v203
    %591 = vmatpush.bf16.msra.mxu0 %v201
    %592 = vmatmul.bf16.gmra.mxu0 %v569
    %v593 = vpop.f32.mrf.mxu0
    %v594 = vadd.f32 0.0, %v593
    %v595 = vpop.f32.mrf.mxu0
    %596 = vdwg.mxu0
    %v598 = vrot.slane %v581, 6
    %v600 = vadd.f32 %v123, %v598
    %v601 = vadd.f32 %v594, %v251
    %v603 = vrot.slane %v600, 2
    %v606 = vrot.slane %v601, 6
    %v608 = vsel %vm260, %v603, %v606
    %v609 = vxor.u32 %v608, 2147483648
    %v610 = vmul.f32 %v609, 1.442695
    %v611 = vpow.pop %v610
    %v612 = vadd.f32 %v611, 1.0
    %v613 = vrcp.pop %v612
    %v614 = vmul.f32 %v612, %v613
    %v615 = vsub.f32 1.0, %v614
    %v616 = vmul.f32 %v613, %v615
    %v617 = vadd.f32 %v613, %v616
    %vm618 = vweird.f32 %v612
    %vm619 = vweird.f32 %v613
    %vm620 = vmor %vm618, %vm619
    %v621 = vsel %vm620, %v613, %v617
    %v622 = vand.u32 2147483647, %v612
    %vm623 = vcmp.eq.f32.partialorder %v622, 8.507059e+37
    %v624 = vand.u32 %v612, 2147483648
    %v625 = vor.u32 1.1754944e-38, %v624
    %v626 = vsel %vm623, %v625, %v621
    %v627 = vmul.f32 1.0, %v626
    %v628 = vtanh.pop %v608
    %v629 = vmul.f32 %v627, %v551
    %631 = vrot.lane.b32.xlu0 %v628, 64
    %v632 = vpop.permute.xlu0 %631
    %v634 = vmul.f32 %v627, %v632
    %636 = vrot.lane.b32.xlu0 %v634, 32
    %v637 = vpop.permute.xlu0 %636
    %v639 = vadd.f32 %v629, %v637
    %v640 = vtanh.pop %v639
    %642 = vrot.lane.b32.xlu0 %v640, 64
    %v643 = vpop.permute.xlu0 %642
    %v645 = vmul.f32 %v627, %v643
    %647 = vrot.lane.b32.xlu0 %v645, 32
    %v648 = vpop.permute.xlu0 %647
    %v650 = vrot.slane %v645, 2
    %651 = vrot.lane.b32.xlu0 %v650, 64
    %v652 = vpop.permute.xlu0 %651
    %v654 = vsel %vm100, %v648, %v652
    %v655 = vpack.c.bf16 %v654, %v654
    %v657 = vsel %vm216, %v655, 0
    %659 = vmatpush.bf16.msra.mxu0 0
    %660 = vmatpush.bf16.msra.mxu0 0
    %661 = vmatpush.bf16.msra.mxu0 0
    %662 = vmatpush.bf16.msra.mxu0 0
    %663 = vmatpush.bf16.msra.mxu0 %v206
    %664 = vmatpush.bf16.msra.mxu0 %v204
    %665 = vmatpush.bf16.msra.mxu0 %v202
    %666 = vmatpush.bf16.msra.mxu0 %v200
    %667 = vmatmul.bf16.gmra.mxu0 %v657
    %v668 = vpop.f32.mrf.mxu0
    %v669 = vadd.f32 0.0, %v668
    %v670 = vpop.f32.mrf.mxu0
    %671 = vdwg.mxu0
    %672 = vmatpush.bf16.msra.mxu0 0
    %673 = vmatpush.bf16.msra.mxu0 0
    %674 = vmatpush.bf16.msra.mxu0 0
    %675 = vmatpush.bf16.msra.mxu0 0
    %676 = vmatpush.bf16.msra.mxu0 %v207
    %677 = vmatpush.bf16.msra.mxu0 %v205
    %678 = vmatpush.bf16.msra.mxu0 %v203
    %679 = vmatpush.bf16.msra.mxu0 %v201
    %680 = vmatmul.bf16.gmra.mxu0 %v657
    %v681 = vpop.f32.mrf.mxu0
    %v682 = vadd.f32 0.0, %v681
    %v683 = vpop.f32.mrf.mxu0
    %684 = vdwg.mxu0
    %v686 = vrot.slane %v669, 4
    %v688 = vadd.f32 %v123, %v686
    %v689 = vadd.f32 %v682, %v251
    %v691 = vrot.slane %v688, 4
    %v694 = vrot.slane %v689, 6
    %v696 = vsel %vm260, %v691, %v694
    %v697 = vxor.u32 %v696, 2147483648
    %v698 = vmul.f32 %v697, 1.442695
    %v699 = vpow.pop %v698
    %v700 = vadd.f32 %v699, 1.0
    %v701 = vrcp.pop %v700
    %v702 = vmul.f32 %v700, %v701
    %v703 = vsub.f32 1.0, %v702
    %v704 = vmul.f32 %v701, %v703
    %v705 = vadd.f32 %v701, %v704
    %vm706 = vweird.f32 %v700
    %vm707 = vweird.f32 %v701
    %vm708 = vmor %vm706, %vm707
    %v709 = vsel %vm708, %v701, %v705
    %v710 = vand.u32 2147483647, %v700
    %vm711 = vcmp.eq.f32.partialorder %v710, 8.507059e+37
    %v712 = vand.u32 %v700, 2147483648
    %v713 = vor.u32 1.1754944e-38, %v712
    %v714 = vsel %vm711, %v713, %v709
    %v715 = vmul.f32 1.0, %v714
    %v716 = vtanh.pop %v696
    %v717 = vmul.f32 %v715, %v639
    %719 = vrot.lane.b32.xlu0 %v716, 64
    %v720 = vpop.permute.xlu0 %719
    %v722 = vmul.f32 %v715, %v720
    %724 = vrot.lane.b32.xlu0 %v722, 32
    %v725 = vpop.permute.xlu0 %724
    %v727 = vadd.f32 %v717, %v725
    %v728 = vtanh.pop %v727
    %730 = vrot.lane.b32.xlu0 %v728, 64
    %v731 = vpop.permute.xlu0 %730
    %v733 = vmul.f32 %v715, %v731
    %735 = vrot.lane.b32.xlu0 %v733, 32
    %v736 = vpop.permute.xlu0 %735
    %v738 = vrot.slane %v733, 2
    %739 = vrot.lane.b32.xlu0 %v738, 64
    %v740 = vpop.permute.xlu0 %739
    %v742 = vsel %vm100, %v736, %v740
    %v743 = vpack.c.bf16 %v742, %v742
    %v745 = vsel %vm216, %v743, 0
    %747 = vmatpush.bf16.msra.mxu0 0
    %748 = vmatpush.bf16.msra.mxu0 0
    %749 = vmatpush.bf16.msra.mxu0 0
    %750 = vmatpush.bf16.msra.mxu0 0
    %751 = vmatpush.bf16.msra.mxu0 %v206
    %752 = vmatpush.bf16.msra.mxu0 %v204
    %753 = vmatpush.bf16.msra.mxu0 %v202
    %754 = vmatpush.bf16.msra.mxu0 %v200
    %755 = vmatmul.bf16.gmra.mxu0 %v745
    %v756 = vpop.f32.mrf.mxu0
    %v757 = vadd.f32 0.0, %v756
    %v758 = vpop.f32.mrf.mxu0
    %759 = vdwg.mxu0
    %760 = vmatpush.bf16.msra.mxu0 0
    %761 = vmatpush.bf16.msra.mxu0 0
    %762 = vmatpush.bf16.msra.mxu0 0
    %763 = vmatpush.bf16.msra.mxu0 0
    %764 = vmatpush.bf16.msra.mxu0 %v207
    %765 = vmatpush.bf16.msra.mxu0 %v205
    %766 = vmatpush.bf16.msra.mxu0 %v203
    %767 = vmatpush.bf16.msra.mxu0 %v201
    %768 = vmatmul.bf16.gmra.mxu0 %v745
    %v769 = vpop.f32.mrf.mxu0
    %v770 = vadd.f32 0.0, %v769
    %v771 = vpop.f32.mrf.mxu0
    %772 = vdwg.mxu0
    %v774 = vrot.slane %v757, 2
    %v776 = vadd.f32 %v123, %v774
    %v777 = vadd.f32 %v770, %v251
    %v779 = vrot.slane %v776, 6
    %v782 = vrot.slane %v777, 6
    %v784 = vsel %vm260, %v779, %v782
    %v785 = vxor.u32 %v784, 2147483648
    %v786 = vmul.f32 %v785, 1.442695
    %v787 = vpow.pop %v786
    %v788 = vadd.f32 %v787, 1.0
    %v789 = vrcp.pop %v788
    %v790 = vmul.f32 %v788, %v789
    %v791 = vsub.f32 1.0, %v790
    %v792 = vmul.f32 %v789, %v791
    %v793 = vadd.f32 %v789, %v792
    %vm794 = vweird.f32 %v788
    %vm795 = vweird.f32 %v789
    %vm796 = vmor %vm794, %vm795
    %v797 = vsel %vm796, %v789, %v793
    %v798 = vand.u32 2147483647, %v788
    %vm799 = vcmp.eq.f32.partialorder %v798, 8.507059e+37
    %v800 = vand.u32 %v788, 2147483648
    %v801 = vor.u32 1.1754944e-38, %v800
    %v802 = vsel %vm799, %v801, %v797
    %v803 = vmul.f32 1.0, %v802
    %v804 = vtanh.pop %v784
    %v805 = vmul.f32 %v803, %v727
    %807 = vrot.lane.b32.xlu0 %v804, 64
    %v808 = vpop.permute.xlu0 %807
    %v810 = vmul.f32 %v803, %v808
    %812 = vrot.lane.b32.xlu0 %v810, 32
    %v813 = vpop.permute.xlu0 %812
    %v815 = vadd.f32 %v805, %v813
    %v816 = vtanh.pop %v815
    %818 = vrot.lane.b32.xlu0 %v816, 64
    %v819 = vpop.permute.xlu0 %818
    %v821 = vmul.f32 %v803, %v819
    %823 = vrot.lane.b32.xlu0 %v821, 32
    %v824 = vpop.permute.xlu0 %823
    %v826 = vrot.slane %v821, 2
    %827 = vrot.lane.b32.xlu0 %v826, 64
    %v828 = vpop.permute.xlu0 %827
    %v830 = vsel %vm100, %v824, %v828
    %v831 = vpack.c.bf16 %v830, %v830
    %v833 = vsel %vm216, %v831, 0
    %835 = vmatpush.bf16.msra.mxu0 0
    %836 = vmatpush.bf16.msra.mxu0 0
    %837 = vmatpush.bf16.msra.mxu0 0
    %838 = vmatpush.bf16.msra.mxu0 0
    %839 = vmatpush.bf16.msra.mxu0 %v207
    %840 = vmatpush.bf16.msra.mxu0 %v205
    %841 = vmatpush.bf16.msra.mxu0 %v203
    %842 = vmatpush.bf16.msra.mxu0 %v201
    %843 = vmatmul.bf16.gmra.mxu0 %v833
    %v844 = vpop.f32.mrf.mxu0
    %v845 = vadd.f32 0.0, %v844
    %v846 = vpop.f32.mrf.mxu0
    %847 = vdwg.mxu0
    %v848 = vadd.f32 %v845, %v251
    %v849 = vxor.u32 %v848, 2147483648
    %v850 = vmul.f32 %v849, 1.442695
    %v851 = vpow.pop %v850
    %v852 = vadd.f32 %v851, 1.0
    %v853 = vrcp.pop %v852
    %v854 = vmul.f32 %v852, %v853
    %v855 = vsub.f32 1.0, %v854
    %v856 = vmul.f32 %v853, %v855
    %v857 = vadd.f32 %v853, %v856
    %vm858 = vweird.f32 %v852
    %vm859 = vweird.f32 %v853
    %vm860 = vmor %vm858, %vm859
    %v861 = vsel %vm860, %v853, %v857
    %v862 = vand.u32 2147483647, %v852
    %vm863 = vcmp.eq.f32.partialorder %v862, 8.507059e+37
    %v864 = vand.u32 %v852, 2147483648
    %v865 = vor.u32 1.1754944e-38, %v864
    %v866 = vsel %vm863, %v865, %v861
    %v867 = vmul.f32 1.0, %v866
    %v868 = vtanh.pop %v848
    %v870 = vrot.slane %v815, 2
    %v872 = vmul.f32 %v867, %v870
    %874 = vrot.lane.b32.xlu0 %v868, 64
    %v875 = vpop.permute.xlu0 %874
    %v877 = vmul.f32 %v867, %v875
    %879 = vrot.lane.b32.xlu0 %v877, 32
    %v880 = vpop.permute.xlu0 %879
    %v882 = vadd.f32 %v872, %v880
    %v883 = vtanh.pop %v882
    %885 = vrot.lane.b32.xlu0 %v883, 64
    %v886 = vpop.permute.xlu0 %885
    %v888 = vmul.f32 %v867, %v886
    %v890 = vrot.slane %v475, 6
    %v892 = vrot.slane %v557, 4
    %v895 = vrot.slane %v821, 6
    %v898 = vrot.slane %v888, 2
    %v900 = vsel %vm260, %v304, %v387
    %vm901 = vcmask 1043456
    %v902 = vsel %vm901, %v900, %v890
    %vm903 = vcmask 1045504
    %v904 = vsel %vm903, %v902, %v892
    %v905 = vsel %vm260, %v650, %v733
    %v906 = vsel %vm901, %v905, %v895
    %v907 = vsel %vm903, %v906, %v898
    %v908 = vpack.c.bf16 %v907, %v904
    %v909 = vld [vmem:[%s7] sm:$0xf]
    %v910 = vld [vmem:[%s7 + $0x4] sm:$0xf]
    %v911 = vld [vmem:[%s7 + $0x8] sm:$0xf]
    %v912 = vld [vmem:[%s7 + $0xc] sm:$0xf]
    %v913 = vld [vmem:[%s8] sm:$0x1]
    %v915 = vperm.slane %v913, 0
    %918 = vrot.lane.b32.xlu0 %v908, 32
    %v919 = vpop.permute.xlu0 %918
    %v924 = vunpack.c.l.b16 %v909
    %v925 = vunpack.c.l.b16 %v910
    %v926 = vunpack.c.l.b16 %v911
    %v927 = vunpack.c.l.b16 %v912
    %v928 = vpack.c.b16 %v925, %v924
    %v929 = vpack.c.b16 %v927, %v926
    %v933 = vsel %vm100, %v919, 0
    %935 = vmatpush.bf16.msra.mxu0 0
    %936 = vmatpush.bf16.msra.mxu0 0
    %937 = vmatpush.bf16.msra.mxu0 0
    %938 = vmatpush.bf16.msra.mxu0 0
    %939 = vmatpush.bf16.msra.mxu0 0
    %940 = vmatpush.bf16.msra.mxu0 0
    %941 = vmatpush.bf16.msra.mxu0 %v929
    %942 = vmatpush.bf16.msra.mxu0 %v928
    %943 = vmatmul.bf16.gmra.mxu0 %v933
    %v944 = vpop.f32.mrf.mxu0
    %v945 = vadd.f32 %v915, %v944
    %v946 = vpop.f32.mrf.mxu0
    %v947 = vadd.f32 %v915, %v946
    %948 = vdwg.mxu0
    %949 = vst [vmem:[%s9] sm:$0xff] %v945
    %950 = vst [vmem:[%s9 + $0x8] sm:$0xff] %v947
    // Predicated region
    $region42: #{_lambda_.1} parent=1 // pred_check
      _
    $region43: #{_lambda_.1} parent=1 // pred_check_branch
      %952 = sbr.rel (0) target = $region45
    $region44: #{_lambda_.1} parent=1 // pred_region
      _
    $region45: #{_lambda_.1} parent=1 // pred_fallthru
      _
    // Predicated region
    $region46: #{_lambda_.1} parent=1 // pred_check
      _
    $region47: #{_lambda_.1} parent=1 // pred_check_branch
      %954 = sbr.rel (0) target = $region49
    $region48: #{_lambda_.1} parent=1 // pred_region
      _
    $region49: #{_lambda_.1} parent=1 // pred_fallthru
      _
    %955 = vsyncpa [#allocation3], 1

</llo_original>
